<compile_context>
chip_gen: v5e
topology: v5e:2x2
jax: 0.10.0
libtpu: 0.0.40
codegen_flags: <defaults>
</compile_context>

<pallas_src>
import jax
import jax.numpy as jnp
from jax.experimental import pallas as pl
from jax.experimental.pallas import tpu as pltpu

_MIB = 1024 * 1024


def _round_up(x, m):
    return ((x + m - 1) // m) * m


def _vmem_capacity_bytes():
    """Physical per-core VMEM (generation aware); conservative fallback = 64 MiB (v7x)."""
    try:
        cap = getattr(pltpu.get_tpu_info(), "vmem_capacity_bytes", None)
        if cap:
            return int(cap)
    except Exception:
        pass
    return 64 * _MIB


def _svd_linear_kernel_bias(x_ref, w1_ref, w2_ref, b_ref, o_ref, h_ref):
    # First matmul only at the first out_features tile of each row tile;
    # h lives in a VMEM scratch and is reused for every j.
    @pl.when(pl.program_id(1) == 0)
    def _():
        h_ref[...] = jnp.dot(x_ref[...], w1_ref[...],
                             preferred_element_type=jnp.float32)

    w2v = w2_ref[...]
    h = h_ref[...].astype(w2v.dtype)            # bf16 x bf16 (f32 acc) MXU path
    out = jnp.dot(h, w2v, preferred_element_type=jnp.float32)
    o_ref[...] = (out + b_ref[...].astype(jnp.float32)).astype(o_ref.dtype)


def _svd_linear_kernel_nobias(x_ref, w1_ref, w2_ref, o_ref, h_ref):
    @pl.when(pl.program_id(1) == 0)
    def _():
        h_ref[...] = jnp.dot(x_ref[...], w1_ref[...],
                             preferred_element_type=jnp.float32)

    w2v = w2_ref[...]
    h = h_ref[...].astype(w2v.dtype)
    o_ref[...] = jnp.dot(h, w2v,
                         preferred_element_type=jnp.float32).astype(o_ref.dtype)


def svd_linear_for_width(x, w1, w2, bias=None, *, tm=512, tn=512,
                         compute_dtype=jnp.bfloat16,
                         vmem_budget_bytes=None):
    """Forward of SVDLinearForWidth: (x @ w1) @ w2 (+ bias).

    x:    [..., in_f]
    w1:   [in_f, rank]
    w2:   [rank, out_f]
    bias: [out_f] or None
    compute_dtype: streaming/compute dtype for x/w1/w2 (default bf16; pass None
                   to keep input dtypes). Accumulation is always f32 and the
                   output keeps x.dtype.
    """
    in_f, rank = w1.shape
    rank2, out_f = w2.shape
    assert rank == rank2 and x.shape[-1] == in_f
    assert tm % 8 == 0 and tn % 128 == 0

    out_dtype = x.dtype
    lead = x.shape[:-1]
    M = 1
    for d in lead:
        M *= d
    x2 = x.reshape(M, in_f)

    if compute_dtype is not None:
        x2 = x2.astype(compute_dtype)
        w1 = w1.astype(compute_dtype)
        w2 = w2.astype(compute_dtype)

    has_bias = bias is not None
    b2 = bias.reshape(1, out_f) if has_bias else None

    x_isz = jnp.dtype(x2.dtype).itemsize
    w_isz = jnp.dtype(w1.dtype).itemsize
    o_isz = jnp.dtype(out_dtype).itemsize
    b_isz = jnp.dtype(b2.dtype).itemsize if has_bias else 0

    # ---- generation-aware VMEM budget ----
    cap = _vmem_capacity_bytes()
    if vmem_budget_bytes is None:
        vmem_budget_bytes = (96 * _MIB if cap >= 120 * _MIB
                             else max(24 * _MIB, cap - 20 * _MIB))

    # ---- out_features tile: lane-dense multiple of 128 (partial last tile ok) ----
    tn_eff = out_f if out_f <= max(tn, 128) else tn

    # ---- row tile: as large as possible, multiple of 8 ----
    tm_eff = max(8, (min(tm, _round_up(M, 8)) // 8) * 8)
    # Keep >= 2 row tiles when there is real work so both v7x TCs are busy.
    if M >= 256 and pl.cdiv(M, tm_eff) < 2:
        tm_eff = max(8, _round_up((M + 1) // 2, 8))

    def _footprint(tm_e, tn_e):
        # Inputs/outputs double-buffered by the BlockSpec pipeline; w1 counted
        # double-buffered too (constant index_map, conservative).
        buf = 2 * (tm_e * in_f * x_isz                    # x row tile
                   + in_f * rank * w_isz                  # w1 (resident)
                   + rank * tn_e * w_isz                  # w2 column tile
                   + (tn_e * b_isz if has_bias else 0)    # bias tile
                   + tm_e * tn_e * o_isz)                 # output tile
        buf += tm_e * rank * 4                            # h scratch (f32)
        buf += tm_e * tn_e * 4 + tm_e * rank * 4          # in-body f32 temporaries
        return buf

    # Shrink tiles until the footprint fits (prefer keeping the row tile large).
    while _footprint(tm_eff, tn_eff) > vmem_budget_bytes:
        if tn_eff > 512:
            tn_eff = max(512, _round_up(tn_eff // 2, 128))
        elif tm_eff > 128:
            tm_eff = max(128, _round_up(tm_eff // 2, 8))
        elif tn_eff > 128:
            tn_eff = 128
        elif tm_eff > 8:
            tm_eff = max(8, (tm_eff // 2 // 8) * 8)
        else:
            break
    # TODO(synk): for extremely large in_features, tile in_f (K-axis accumulation
    # into the h scratch or a two-pallas_call split) instead of letting tm shrink.

    grid = (pl.cdiv(M, tm_eff), pl.cdiv(out_f, tn_eff))

    fp = _footprint(tm_eff, tn_eff)
    vmem_limit = int(min(cap - 10 * _MIB, 112 * _MIB,
                         max(16 * _MIB, fp * 3 // 2)))

    cost = pl.CostEstimate(
        flops=2 * M * (in_f * rank + rank * out_f),
        transcendentals=0,
        bytes_accessed=(M * in_f * x_isz + in_f * rank * w_isz
                        + rank * out_f * w_isz + out_f * b_isz
                        + M * out_f * o_isz),
    )

    x_spec = pl.BlockSpec((tm_eff, in_f), lambda i, j: (i, 0))     # row tile, const over j
    w1_spec = pl.BlockSpec((in_f, rank), lambda i, j: (0, 0))      # resident
    w2_spec = pl.BlockSpec((rank, tn_eff), lambda i, j: (0, j))    # column tile
    out_spec = pl.BlockSpec((tm_eff, tn_eff), lambda i, j: (i, j))

    if has_bias:
        kernel = _svd_linear_kernel_bias
        in_specs = [x_spec, w1_spec, w2_spec,
                    pl.BlockSpec((1, tn_eff), lambda i, j: (0, j))]
        args = (x2, w1, w2, b2)
    else:
        kernel = _svd_linear_kernel_nobias
        in_specs = [x_spec, w1_spec, w2_spec]
        args = (x2, w1, w2)

    out2 = pl.pallas_call(
        kernel,
        out_shape=jax.ShapeDtypeStruct((M, out_f), out_dtype),
        grid_spec=pltpu.PrefetchScalarGridSpec(
            num_scalar_prefetch=0,
            grid=grid,
            in_specs=in_specs,
            out_specs=out_spec,
            scratch_shapes=[pltpu.VMEM((tm_eff, rank), jnp.float32)],
        ),
        compiler_params=pltpu.CompilerParams(
            dimension_semantics=("parallel", "arbitrary"),
            vmem_limit_bytes=vmem_limit),
        cost_estimate=cost,
    )(*args)

    return out2.reshape(*lead, out_f)


if __name__ == "__main__":
    # Small, deterministic synthetic setup (matches module __init__ shapes):
    #   w1: [in_features, rank], w2: [rank, out_features], bias: [out_features]
    batch, seq = 2, 8
    in_features, rank, out_features = 32, 16, 64

    key = jax.random.PRNGKey(0)
    kx, k1, k2, kb, kx2 = jax.random.split(key, 5)
    x = jax.random.normal(kx, (batch, seq, in_features), dtype=jnp.float32)
    w1 = jax.random.normal(k1, (in_features, rank), dtype=jnp.float32) * 0.1
    w2 = jax.random.normal(k2, (rank, out_features), dtype=jnp.float32) * 0.1
    bias = jax.random.normal(kb, (out_features,), dtype=jnp.float32) * 0.1

    # Pure-JAX reference of the PyTorch forward: (x @ w1) @ w2 + bias
    ref = (x @ w1) @ w2 + bias

    # Exact-dtype path (compute_dtype=None keeps f32 end to end).
    out = jax.block_until_ready(
        svd_linear_for_width(x, w1, w2, bias, compute_dtype=None))
    assert out.shape == (batch, seq, out_features)
    assert jnp.allclose(out, ref, atol=1e-5, rtol=1e-5), "mismatch vs reference (f32)"

    # Default perf path: bf16 streaming, f32 accumulation, f32 output.
    out_bf = jax.block_until_ready(svd_linear_for_width(x, w1, w2, bias))
    assert out_bf.shape == (batch, seq, out_features)
    assert jnp.allclose(out_bf, ref, atol=5e-2, rtol=5e-2), "mismatch vs reference (bf16)"

    # Odd leading shape (M not a multiple of 8) exercises the partial-block path;
    # also covers the bias=None branch of the module.
    x_odd = jax.random.normal(kx2, (3, 5, in_features), dtype=jnp.float32)
    out_odd = jax.block_until_ready(
        svd_linear_for_width(x_odd, w1, w2, None, compute_dtype=None))
    ref_odd = (x_odd @ w1) @ w2
    assert out_odd.shape == (3, 5, out_features)
    assert jnp.allclose(out_odd, ref_odd, atol=1e-5, rtol=1e-5), "mismatch (odd M)"

    print("KERNEL_OK")
</pallas_src>

<mosaic_0001>
module attributes {stable_mosaic.version = 11 : i64} {
  func.func @_svd_linear_kernel_bias(%arg0: i32, %arg1: i32, %arg2: memref<16x32xf32, #tpu.memory_space<vmem>>, %arg3: memref<32x16xf32, #tpu.memory_space<vmem>>, %arg4: memref<16x64xf32, #tpu.memory_space<vmem>>, %arg5: memref<1x64xf32, #tpu.memory_space<vmem>>, %arg6: memref<16x64xf32, #tpu.memory_space<vmem>>, %arg7: memref<16x16xf32, #tpu.memory_space<vmem>>) attributes {dimension_semantics = [#tpu.dimension_semantics<parallel>, #tpu.dimension_semantics<arbitrary>], iteration_bounds = array<i64: 1, 1>, scalar_prefetch = 0 : i64, scratch_operands = 1 : i64, tpu.core_type = #tpu.core_type<tc>, window_params = [{transform_indices = @transform_0, window_bounds = array<i64: 16, 32>}, {pipeline_mode = #tpu.pipeline_mode<synchronous>, transform_indices = @transform_1, window_bounds = array<i64: 32, 16>}, {transform_indices = @transform_2, window_bounds = array<i64: 16, 64>}, {transform_indices = @transform_3, window_bounds = array<i64: 1, 64>}, {transform_indices = @transform_4, window_bounds = array<i64: 16, 64>}]} {
    %c0_i32 = arith.constant 0 : i32
    %0 = arith.cmpi eq, %arg1, %c0_i32 : i32
    %1 = arith.extui %0 : i1 to i32
    %c0_i32_0 = arith.constant 0 : i32
    %2 = arith.cmpi ne, %1, %c0_i32_0 : i32
    scf.if %2 {
      %c0_8 = arith.constant 0 : index
      %c0_9 = arith.constant 0 : index
      %10 = vector.load %arg2[%c0_8, %c0_9] : memref<16x32xf32, #tpu.memory_space<vmem>>, vector<16x32xf32>
      %c0_10 = arith.constant 0 : index
      %c0_11 = arith.constant 0 : index
      %11 = vector.load %arg3[%c0_10, %c0_11] : memref<32x16xf32, #tpu.memory_space<vmem>>, vector<32x16xf32>
      %cst_12 = arith.constant dense<0.000000e+00> : vector<16x16xf32>
      %12 = tpu.matmul %10, %11, %cst_12 {dimension_numbers = #tpu.dot_dimension_numbers<[1], [0], [0], [1], [0, 0, 1, 1], [], []>} : vector<16x32xf32>, vector<32x16xf32>, vector<16x16xf32> -> vector<16x16xf32>
      %c0_13 = arith.constant 0 : index
      %c0_14 = arith.constant 0 : index
      %13 = vector.load %arg7[%c0_13, %c0_14] : memref<16x16xf32, #tpu.memory_space<vmem>>, vector<16x16xf32>
      tpu.vector_store %arg7[%c0_13, %c0_14], %12 {strides = array<i32>} : memref<16x16xf32, #tpu.memory_space<vmem>>, vector<16x16xf32>,
    } else {
    }
    %c0 = arith.constant 0 : index
    %c0_1 = arith.constant 0 : index
    %3 = vector.load %arg4[%c0, %c0_1] : memref<16x64xf32, #tpu.memory_space<vmem>>, vector<16x64xf32>
    %c0_2 = arith.constant 0 : index
    %c0_3 = arith.constant 0 : index
    %4 = vector.load %arg7[%c0_2, %c0_3] : memref<16x16xf32, #tpu.memory_space<vmem>>, vector<16x16xf32>
    %cst = arith.constant dense<0.000000e+00> : vector<16x64xf32>
    %5 = tpu.matmul %4, %3, %cst {dimension_numbers = #tpu.dot_dimension_numbers<[1], [0], [0], [1], [0, 0, 1, 1], [], []>} : vector<16x16xf32>, vector<16x64xf32>, vector<16x64xf32> -> vector<16x64xf32>
    %c0_4 = arith.constant 0 : index
    %c0_5 = arith.constant 0 : index
    %6 = vector.load %arg5[%c0_4, %c0_5] : memref<1x64xf32, #tpu.memory_space<vmem>>, vector<1x64xf32>
    %7 = vector.broadcast %6 : vector<1x64xf32> to vector<16x64xf32>
    %8 = arith.addf %5, %7 : vector<16x64xf32>
    %c0_6 = arith.constant 0 : index
    %c0_7 = arith.constant 0 : index
    %9 = vector.load %arg6[%c0_6, %c0_7] : memref<16x64xf32, #tpu.memory_space<vmem>>, vector<16x64xf32>
    tpu.vector_store %arg6[%c0_6, %c0_7], %8 {strides = array<i32>} : memref<16x64xf32, #tpu.memory_space<vmem>>, vector<16x64xf32>,
    return
  }
  func.func @transform_0(%arg0: i32, %arg1: i32) -> (i32, i32) {
    %c0_i32 = arith.constant 0 : i32
    %c0_i32_0 = arith.constant 0 : i32
    return %arg0, %c0_i32 : i32, i32
  }
  func.func @transform_1(%arg0: i32, %arg1: i32) -> (i32, i32) {
    %c0_i32 = arith.constant 0 : i32
    %c0_i32_0 = arith.constant 0 : i32
    %c0_i32_1 = arith.constant 0 : i32
    return %c0_i32, %c0_i32_0 : i32, i32
  }
  func.func @transform_2(%arg0: i32, %arg1: i32) -> (i32, i32) {
    %c0_i32 = arith.constant 0 : i32
    %c0_i32_0 = arith.constant 0 : i32
    return %c0_i32, %arg1 : i32, i32
  }
  func.func @transform_3(%arg0: i32, %arg1: i32) -> (i32, i32) {
    %c0_i32 = arith.constant 0 : i32
    %c0_i32_0 = arith.constant 0 : i32
    return %c0_i32, %arg1 : i32, i32
  }
  func.func @transform_4(%arg0: i32, %arg1: i32) -> (i32, i32) {
    %c0_i32 = arith.constant 0 : i32
    return %arg0, %arg1 : i32, i32
  }
}

</mosaic_0001>

<llo_original>
// kernel: tpu_custom_call.1
$region0: #{tpu_custom_call.1}
  #allocation0 [shape = 'u32[]', space=smem, size = 0x4, offset = 0x4, fixed_abs, tag = 'smem constant byte address 0x4 - core index']
  #allocation1 [shape = 'u32[72,128]{1,0:T(1,128)}', space=vmem, size = 0x9000, scoped, tag = 'internal scratch']
  #allocation2 [shape = 'f32[16,16]{1,0:T(8,128)}', space=vmem, size = 0x2000, scoped, tag = 'scratch operand']
  %s0 = inlined_call_operand.vmem [shape: f32[16,32], index: 0, kind: input, shape index: {}]
  %s1 = inlined_call_operand.vmem [shape: f32[32,16], index: 1, kind: input, shape index: {}]
  %s2 = inlined_call_operand.vmem [shape: f32[16,64], index: 2, kind: input, shape index: {}]
  %s3 = inlined_call_operand.vmem [shape: f32[1,64], index: 3, kind: input, shape index: {}]
  %s4 = inlined_call_operand.hbm [shape: f32[16,64], index: 4, kind: output, shape index: {}]
  %s5 = sld [smem:[#allocation0]]
  $region30: #{tpu_custom_call.1} parent=0
    _
  %s7 = ssub.s32 1, %s5
  %s8 = scalar_select 0, %s7, %s5
  $region1: #{tpu_custom_call.1} parent=0
    #allocation3 [shape = 'u8[8192]{0}', space=vmem, size = 0x2000, scoped, tag = 'output window, operand 0, single buffered']
    #allocation4 [shape = 's32[1]{0}', space=sflag, size = 0x4, scoped, tag = 'scoped memory for tpu_custom_call.1']
    %9 = vsyncpa [#allocation4], 0
    // Predicated region
    $region2: #{tpu_custom_call.1} parent=1 // pred_check
      _
    $region3: #{tpu_custom_call.1} parent=1 // pred_check_branch
      %11 = sbr.rel (0) target = $region5
    $region4: #{tpu_custom_call.1} parent=1 // pred_region
      _
    $region5: #{tpu_custom_call.1} parent=1 // pred_fallthru
      _
    // Predicated region
    $region6: #{tpu_custom_call.1} parent=1 // pred_check
      _
    $region7: #{tpu_custom_call.1} parent=1 // pred_check_branch
      %13 = sbr.rel (0) target = $region9
    $region8: #{tpu_custom_call.1} parent=1 // pred_region
      _
    $region9: #{tpu_custom_call.1} parent=1 // pred_fallthru
      _
    // Predicated region
    $region10: #{tpu_custom_call.1} parent=1 // pred_check
      _
    $region11: #{tpu_custom_call.1} parent=1 // pred_check_branch
      %15 = sbr.rel (0) target = $region13
    $region12: #{tpu_custom_call.1} parent=1 // pred_region
      _
    $region13: #{tpu_custom_call.1} parent=1 // pred_fallthru
      _
    // Predicated region
    $region14: #{tpu_custom_call.1} parent=1 // pred_check
      _
    $region15: #{tpu_custom_call.1} parent=1 // pred_check_branch
      %17 = sbr.rel (0) target = $region17
    $region16: #{tpu_custom_call.1} parent=1 // pred_region
      _
    $region17: #{tpu_custom_call.1} parent=1 // pred_fallthru
      _
    %p18 = scmp.eq.s32.totalorder 0, 0
    // Predicated region
    $region18: #{tpu_custom_call.1} parent=1 // pred_check
      %p19 = pneg %p18
    $region19: #{tpu_custom_call.1} parent=1 // pred_check_branch
      %21 = sbr.rel (%p19) target = $region21
    $region20: #{tpu_custom_call.1} parent=1 // pred_region
      %v22 = vld [vmem:[%s0] sm:$0xff]
      %v23 = vld [vmem:[%s0 + $0x8] sm:$0xff]
      %v24 = vld [vmem:[%s1] sm:$0xff]
      %v25 = vld [vmem:[%s1 + $0x8] sm:$0xff]
      %v26 = vld [vmem:[%s1 + $0x10] sm:$0xff]
      %v27 = vld [vmem:[%s1 + $0x18] sm:$0xff]
      %vm28 = vcmask 261120
      %v30 = vsel %vm28, %v22, 0
      %v33 = vsel %vm28, %v23, 0
      %35 = vmatpush.msra.mxu0 0.0
      %36 = vmatpush.msra.mxu0 0.0
      %37 = vmatpush.msra.mxu0 0.0
      %38 = vmatpush.msra.mxu0 0.0
      %39 = vmatpush.msra.mxu0 0.0
      %40 = vmatpush.msra.mxu0 0.0
      %41 = vmatpush.msra.mxu0 0.0
      %42 = vmatpush.msra.mxu0 0.0
      %43 = vmatpush.msra.mxu0 0.0
      %44 = vmatpush.msra.mxu0 0.0
      %45 = vmatpush.msra.mxu0 0.0
      %46 = vmatpush.msra.mxu0 0.0
      %47 = vmatpush.msra.mxu0 %v27
      %48 = vmatpush.msra.mxu0 %v26
      %49 = vmatpush.msra.mxu0 %v25
      %50 = vmatpush.msra.mxu0 %v24
      %51 = vmatmul.f32.gmra.mxu0 %v30
      %v52 = vpop.f32.mrf.mxu0
      %v53 = vadd.f32 0.0, %v52
      %54 = vmatmul.f32.gmra.mxu0 %v33
      %v55 = vpop.f32.mrf.mxu0
      %v56 = vadd.f32 0.0, %v55
      %57 = vdwg.mxu0
      %vm58 = vcmask 130048
      %59 = vst.msk [vmem:[#allocation2] sm:$0xff] %vm58, %v53
      %60 = vst.msk [vmem:[#allocation2 + $0x8] sm:$0xff] %vm58, %v56
    $region21: #{tpu_custom_call.1} parent=1 // pred_fallthru
      _
    %v61 = vld [vmem:[%s2] sm:$0xff]
    %v62 = vld [vmem:[%s2 + $0x8] sm:$0xff]
    %v63 = vld [vmem:[#allocation2] sm:$0xff]
    %v64 = vld [vmem:[#allocation2 + $0x8] sm:$0xff]
    %v65 = vld [vmem:[%s3] sm:$0x1]
    %v67 = vperm.slane %v65, 0
    %vm69 = vcmask 130048
    %v71 = vsel %vm69, %v63, 0
    %v74 = vsel %vm69, %v64, 0
    %76 = vmatpush.msra.mxu0 0.0
    %77 = vmatpush.msra.mxu0 0.0
    %78 = vmatpush.msra.mxu0 0.0
    %79 = vmatpush.msra.mxu0 0.0
    %80 = vmatpush.msra.mxu0 0.0
    %81 = vmatpush.msra.mxu0 0.0
    %82 = vmatpush.msra.mxu0 0.0
    %83 = vmatpush.msra.mxu0 0.0
    %84 = vmatpush.msra.mxu0 0.0
    %85 = vmatpush.msra.mxu0 0.0
    %86 = vmatpush.msra.mxu0 0.0
    %87 = vmatpush.msra.mxu0 0.0
    %88 = vmatpush.msra.mxu0 0.0
    %89 = vmatpush.msra.mxu0 0.0
    %90 = vmatpush.msra.mxu0 %v62
    %91 = vmatpush.msra.mxu0 %v61
    %92 = vmatmul.f32.gmra.mxu0 %v71
    %v93 = vpop.f32.mrf.mxu0
    %v94 = vadd.f32 %v67, %v93
    %95 = vmatmul.f32.gmra.mxu0 %v74
    %v96 = vpop.f32.mrf.mxu0
    %v97 = vadd.f32 %v67, %v96
    %98 = vdwg.mxu0
    %vm99 = vcmask 523264
    %100 = vst.msk [vmem:[#allocation3] sm:$0xff] %vm99, %v94
    %101 = vst.msk [vmem:[#allocation3 + $0x8] sm:$0xff] %vm99, %v97
    // Predicated region
    $region22: #{tpu_custom_call.1} parent=1 // pred_check
      _
    $region23: #{tpu_custom_call.1} parent=1 // pred_check_branch
      %103 = sbr.rel (0) target = $region25
    $region24: #{tpu_custom_call.1} parent=1 // pred_region
      %105 = vsyncadd [#allocation4], 0
      %s106 = sshll.u32 [#allocation3], 4
      %s107 = int_to_ptr.vmem [resolvable:$true] %s106
      %s108 = sshll.u32 %s4, 4
      %s109 = int_to_ptr.hbm [resolvable:$true] %s108
      %114 = dma.vmem_to_hbm [thread:$0]  %s107, 256, %s109, [#allocation4], 128, 128, 8
    $region25: #{tpu_custom_call.1} parent=1 // pred_fallthru
      _
    // Predicated region
    $region26: #{tpu_custom_call.1} parent=1 // pred_check
      _
    $region27: #{tpu_custom_call.1} parent=1 // pred_check_branch
      %116 = sbr.rel (0) target = $region29
    $region28: #{tpu_custom_call.1} parent=1 // pred_region
      %118 = dma.done [#allocation4], 256
    $region29: #{tpu_custom_call.1} parent=1 // pred_fallthru
      _
    %119 = vsyncpa [#allocation4], 1

</llo_original>
